<compile_context>
chip_gen: v7x
topology: tpu7x:2x2x1
jax: 0.10.0
libtpu: 0.0.40
codegen_flags: <defaults>
</compile_context>

<pallas_src>
import functools

import jax
import jax.numpy as jnp
from jax.experimental import pallas as pl
from jax.experimental.pallas import tpu as pltpu

PAD = 128          # lane-dense padded feature width for every layer
N_LAYERS = 3       # [num_states, 64, 64, num_actions]
TILE_B_MAX = 512   # batch rows per grid step (well under 32 MiB scoped VMEM on v7x)


def _round_up(n, m):
    return ((n + m - 1) // m) * m


# ----------------------------------------------------------------------------
# Kernel: one batch tile, whole 3-layer MLP.
#   x_ref : (TILE_B, 128)      f32   (zero-padded features)
#   w_ref : (3, 128, 128)      bf16  (zero-padded, transposed weights: y = x @ W)
#   b_ref : (3, 1, 128)        f32   (zero-padded biases)
#   o_ref : (TILE_B, 128)      f32   (lane-dense padded output)
# ----------------------------------------------------------------------------
def actor_mlp_kernel(x_ref, w_ref, b_ref, o_ref):
    h = x_ref[...].astype(jnp.bfloat16)          # bf16 matmul inputs
    for i in range(N_LAYERS):                    # static unroll
        y = jnp.dot(h, w_ref[i], preferred_element_type=jnp.float32) + b_ref[i]
        a = jnp.tanh(y)                          # bias + tanh in f32 (v5e-safe)
        h = a.astype(jnp.bfloat16) if i < N_LAYERS - 1 else a
    o_ref[...] = h.astype(o_ref.dtype)


@functools.partial(jax.jit, static_argnames=("num_actions",))
def actor_forward(x, w_stack, b_stack, *, num_actions):
    batch, in_dim = x.shape
    tile_b = TILE_B_MAX if batch >= TILE_B_MAX else _round_up(batch, 8)
    padded_b = _round_up(batch, tile_b)

    # Lane-dense, tile-aligned input (pad lanes/rows contribute 0 through the net).
    x_pad = jnp.zeros((padded_b, PAD), jnp.float32).at[:batch, :in_dim].set(x)

    grid = (padded_b // tile_b,)
    flops = 2 * padded_b * N_LAYERS * PAD * PAD
    transcendentals = padded_b * N_LAYERS * PAD
    bytes_accessed = (padded_b * PAD * 4            # x
                      + N_LAYERS * PAD * PAD * 2    # bf16 weight stack
                      + N_LAYERS * PAD * 4          # bias stack
                      + padded_b * PAD * 4)         # output

    out_pad = pl.pallas_call(
        actor_mlp_kernel,
        out_shape=jax.ShapeDtypeStruct((padded_b, PAD), jnp.float32),
        grid_spec=pltpu.PrefetchScalarGridSpec(
            num_scalar_prefetch=0,
            grid=grid,
            in_specs=[
                pl.BlockSpec((tile_b, PAD), lambda i: (i, 0)),
                # Constant index maps -> params DMA'd once, VMEM-resident.
                pl.BlockSpec((N_LAYERS, PAD, PAD), lambda i: (0, 0, 0)),
                pl.BlockSpec((N_LAYERS, 1, PAD), lambda i: (0, 0, 0)),
            ],
            out_specs=pl.BlockSpec((tile_b, PAD), lambda i: (i, 0)),
        ),
        compiler_params=pltpu.CompilerParams(
            dimension_semantics=("parallel",),       # shard batch across TCs (v7x)
            vmem_limit_bytes=32 * 1024 * 1024,
        ),
        cost_estimate=pl.CostEstimate(
            flops=flops,
            transcendentals=transcendentals,
            bytes_accessed=bytes_accessed,
        ),
    )(x_pad, w_stack, b_stack)

    return out_pad[:batch, :num_actions]


# ----------------------------------------------------------------------------
# Parameters mirroring Actor.__init__:
#   orthogonal_init(gain=1.0) on hidden layers, gain=0.01 on the last, zero bias.
# PyTorch weights are (out, in); kernel uses (in, out), zero-padded to 128x128
# and stacked.  Weight stack is bf16 (MXU inputs); biases stay f32.
# ----------------------------------------------------------------------------
def make_actor_params(key, num_states, num_actions, hidden=(64, 64)):
    dims = [num_states, *hidden, num_actions]
    n_layers = len(dims) - 1
    assert n_layers == N_LAYERS
    keys = jax.random.split(key, n_layers)

    w_stack = jnp.zeros((n_layers, PAD, PAD), jnp.float32)
    b_stack = jnp.zeros((n_layers, 1, PAD), jnp.float32)
    weights, biases = [], []
    for i in range(n_layers):
        in_d, out_d = dims[i], dims[i + 1]
        gain = 0.01 if i == n_layers - 1 else 1.0
        w_pt = jax.nn.initializers.orthogonal(scale=gain)(
            keys[i], (out_d, in_d), jnp.float32
        )
        w = w_pt.T                                   # (in, out) for y = x @ W
        b = jnp.zeros((out_d,), jnp.float32)
        weights.append(w)
        biases.append(b)
        w_stack = w_stack.at[i, :in_d, :out_d].set(w)
        b_stack = b_stack.at[i, 0, :out_d].set(b)
    return weights, biases, w_stack.astype(jnp.bfloat16), b_stack


def actor_forward_ref_bf16(x, weights, biases):
    # Mirrors the kernel's numerics: bf16 matmul inputs, f32 accumulate/elementwise.
    s = x
    for w, b in zip(weights, biases):
        s = jnp.tanh(
            jnp.dot(s.astype(jnp.bfloat16), w.astype(jnp.bfloat16),
                    preferred_element_type=jnp.float32) + b
        )
    return s


def actor_forward_ref_f32(x, weights, biases):
    s = x
    for w, b in zip(weights, biases):
        s = jnp.tanh(s @ w + b)
    return s


if __name__ == "__main__":
    # Small, forward-consistent shapes.
    batch = 8
    num_states = 32
    num_actions = 8

    key = jax.random.PRNGKey(0)
    k_params, k_x = jax.random.split(key)

    weights, biases, w_stack, b_stack = make_actor_params(
        k_params, num_states, num_actions
    )
    x = jax.random.normal(k_x, (batch, num_states), jnp.float32)

    out = actor_forward(x, w_stack, b_stack, num_actions=num_actions)
    out = jax.block_until_ready(out)

    assert out.shape == (batch, num_actions)
    ref_bf16 = actor_forward_ref_bf16(x, weights, biases)
    assert jnp.allclose(out, ref_bf16, atol=2e-3, rtol=2e-3), "mismatch vs bf16 ref"
    ref_f32 = actor_forward_ref_f32(x, weights, biases)
    assert jnp.allclose(out, ref_f32, atol=3e-2, rtol=3e-2), "mismatch vs f32 ref"

    # TODO(synk): Actor.get_dist (Normal(mean, exp(sigma)+0.1)) is host-side
    # distribution construction, not part of forward(); left to the JAX wrapper.

    print("KERNEL_OK")
</pallas_src>

<mosaic_0001>
module attributes {stable_mosaic.version = 11 : i64} {
  func.func @actor_mlp_kernel(%arg0: i32, %arg1: memref<8x128xf32, #tpu.memory_space<vmem>>, %arg2: memref<3x128x128xbf16, #tpu.memory_space<vmem>>, %arg3: memref<3x1x128xf32, #tpu.memory_space<vmem>>, %arg4: memref<8x128xf32, #tpu.memory_space<vmem>>) attributes {dimension_semantics = [#tpu.dimension_semantics<parallel>], iteration_bounds = array<i64: 1>, scalar_prefetch = 0 : i64, scratch_operands = 0 : i64, tpu.core_type = #tpu.core_type<tc>, window_params = [{transform_indices = @transform_0, window_bounds = array<i64: 8, 128>}, {pipeline_mode = #tpu.pipeline_mode<synchronous>, transform_indices = @transform_1, window_bounds = array<i64: 3, 128, 128>}, {pipeline_mode = #tpu.pipeline_mode<synchronous>, transform_indices = @transform_2, window_bounds = array<i64: 3, 1, 128>}, {transform_indices = @transform_3, window_bounds = array<i64: 8, 128>}]} {
    %c0 = arith.constant 0 : index
    %c0_0 = arith.constant 0 : index
    %0 = vector.load %arg1[%c0, %c0_0] : memref<8x128xf32, #tpu.memory_space<vmem>>, vector<8x128xf32>
    %1 = arith.truncf %0 : vector<8x128xf32> to vector<8x128xbf16>
    %c0_1 = arith.constant 0 : index
    %c0_2 = arith.constant 0 : index
    %c0_3 = arith.constant 0 : index
    %2 = vector.load %arg2[%c0_1, %c0_2, %c0_3] : memref<3x128x128xbf16, #tpu.memory_space<vmem>>, vector<1x128x128xbf16>
    %3 = vector.shape_cast %2 : vector<1x128x128xbf16> to vector<128x128xbf16>
    %cst = arith.constant dense<0.000000e+00> : vector<8x128xf32>
    %4 = tpu.matmul %1, %3, %cst {dimension_numbers = #tpu.dot_dimension_numbers<[1], [0], [0], [1], [0, 0, 1, 1], [], []>} : vector<8x128xbf16>, vector<128x128xbf16>, vector<8x128xf32> -> vector<8x128xf32>
    %c0_4 = arith.constant 0 : index
    %c0_5 = arith.constant 0 : index
    %c0_6 = arith.constant 0 : index
    %5 = vector.load %arg3[%c0_4, %c0_5, %c0_6] : memref<3x1x128xf32, #tpu.memory_space<vmem>>, vector<1x1x128xf32>
    %6 = vector.shape_cast %5 : vector<1x1x128xf32> to vector<1x128xf32>
    %7 = vector.broadcast %6 : vector<1x128xf32> to vector<8x128xf32>
    %8 = arith.addf %4, %7 : vector<8x128xf32>
    %9 = math.tanh %8 : vector<8x128xf32>
    %10 = arith.truncf %9 : vector<8x128xf32> to vector<8x128xbf16>
    %c1 = arith.constant 1 : index
    %c0_7 = arith.constant 0 : index
    %c0_8 = arith.constant 0 : index
    %11 = vector.load %arg2[%c1, %c0_7, %c0_8] : memref<3x128x128xbf16, #tpu.memory_space<vmem>>, vector<1x128x128xbf16>
    %12 = vector.shape_cast %11 : vector<1x128x128xbf16> to vector<128x128xbf16>
    %cst_9 = arith.constant dense<0.000000e+00> : vector<8x128xf32>
    %13 = tpu.matmul %10, %12, %cst_9 {dimension_numbers = #tpu.dot_dimension_numbers<[1], [0], [0], [1], [0, 0, 1, 1], [], []>} : vector<8x128xbf16>, vector<128x128xbf16>, vector<8x128xf32> -> vector<8x128xf32>
    %c1_10 = arith.constant 1 : index
    %c0_11 = arith.constant 0 : index
    %c0_12 = arith.constant 0 : index
    %14 = vector.load %arg3[%c1_10, %c0_11, %c0_12] : memref<3x1x128xf32, #tpu.memory_space<vmem>>, vector<1x1x128xf32>
    %15 = vector.shape_cast %14 : vector<1x1x128xf32> to vector<1x128xf32>
    %16 = vector.broadcast %15 : vector<1x128xf32> to vector<8x128xf32>
    %17 = arith.addf %13, %16 : vector<8x128xf32>
    %18 = math.tanh %17 : vector<8x128xf32>
    %19 = arith.truncf %18 : vector<8x128xf32> to vector<8x128xbf16>
    %c2 = arith.constant 2 : index
    %c0_13 = arith.constant 0 : index
    %c0_14 = arith.constant 0 : index
    %20 = vector.load %arg2[%c2, %c0_13, %c0_14] : memref<3x128x128xbf16, #tpu.memory_space<vmem>>, vector<1x128x128xbf16>
    %21 = vector.shape_cast %20 : vector<1x128x128xbf16> to vector<128x128xbf16>
    %cst_15 = arith.constant dense<0.000000e+00> : vector<8x128xf32>
    %22 = tpu.matmul %19, %21, %cst_15 {dimension_numbers = #tpu.dot_dimension_numbers<[1], [0], [0], [1], [0, 0, 1, 1], [], []>} : vector<8x128xbf16>, vector<128x128xbf16>, vector<8x128xf32> -> vector<8x128xf32>
    %c2_16 = arith.constant 2 : index
    %c0_17 = arith.constant 0 : index
    %c0_18 = arith.constant 0 : index
    %23 = vector.load %arg3[%c2_16, %c0_17, %c0_18] : memref<3x1x128xf32, #tpu.memory_space<vmem>>, vector<1x1x128xf32>
    %24 = vector.shape_cast %23 : vector<1x1x128xf32> to vector<1x128xf32>
    %25 = vector.broadcast %24 : vector<1x128xf32> to vector<8x128xf32>
    %26 = arith.addf %22, %25 : vector<8x128xf32>
    %27 = math.tanh %26 : vector<8x128xf32>
    %c0_19 = arith.constant 0 : index
    %c0_20 = arith.constant 0 : index
    %28 = vector.load %arg4[%c0_19, %c0_20] : memref<8x128xf32, #tpu.memory_space<vmem>>, vector<8x128xf32>
    tpu.vector_store %arg4[%c0_19, %c0_20], %27 {strides = array<i32>} : memref<8x128xf32, #tpu.memory_space<vmem>>, vector<8x128xf32>,
    return
  }
  func.func @transform_0(%arg0: i32) -> (i32, i32) {
    %c0_i32 = arith.constant 0 : i32
    %c0_i32_0 = arith.constant 0 : i32
    return %arg0, %c0_i32 : i32, i32
  }
  func.func @transform_1(%arg0: i32) -> (i32, i32, i32) {
    %c0_i32 = arith.constant 0 : i32
    %c0_i32_0 = arith.constant 0 : i32
    %c0_i32_1 = arith.constant 0 : i32
    %c0_i32_2 = arith.constant 0 : i32
    return %c0_i32, %c0_i32_0, %c0_i32_1 : i32, i32, i32
  }
  func.func @transform_2(%arg0: i32) -> (i32, i32, i32) {
    %c0_i32 = arith.constant 0 : i32
    %c0_i32_0 = arith.constant 0 : i32
    %c0_i32_1 = arith.constant 0 : i32
    %c0_i32_2 = arith.constant 0 : i32
    return %c0_i32, %c0_i32_0, %c0_i32_1 : i32, i32, i32
  }
  func.func @transform_3(%arg0: i32) -> (i32, i32) {
    %c0_i32 = arith.constant 0 : i32
    %c0_i32_0 = arith.constant 0 : i32
    return %arg0, %c0_i32 : i32, i32
  }
}

</mosaic_0001>

<llo_original>
// kernel: actor_forward.1
$region0: #{actor_forward.1}
  #allocation0 [shape = 'u32[]', space=smem, size = 0x4, offset = 0x4, fixed_abs, tag = 'smem constant byte address 0x4 - core index']
  #allocation1 [shape = 'u32[144,128]{1,0:T(1,128)}', space=vmem, size = 0x12000, scoped, tag = 'internal scratch']
  %s0 = inlined_call_operand.vmem [shape: f32[8,128], index: 0, kind: input, shape index: {}]
  %s1 = inlined_call_operand.hbm [shape: bf16[3,128,128], index: 1, kind: input, shape index: {}]
  %s2 = inlined_call_operand.vmem [shape: f32[3,1,128], index: 2, kind: input, shape index: {}]
  %s3 = inlined_call_operand.hbm [shape: f32[8,128], index: 3, kind: output, shape index: {}]
  %s4 = sld [smem:[#allocation0]]
  $region26: #{actor_forward.1} parent=0
    _
  %s6 = ssub.s32 1, %s4
  %s7 = scalar_select 0, %s6, %s4
  $region1: #{actor_forward.1} parent=0
    #allocation2 [shape = 'u8[98304]{0}', space=vmem, size = 0x18000, scoped, tag = 'input window, operand 1, single buffered']
    #allocation3 [shape = 's32[1]{0}', space=sflag, size = 0x4, scoped, tag = 'scoped memory for actor_forward.1']
    #allocation4 [shape = 's32[1]{0}', space=sflag, size = 0x4, scoped, tag = 'scoped memory for actor_forward.1']
    #allocation5 [shape = 'u8[4096]{0}', space=vmem, size = 0x1000, scoped, tag = 'output window, operand 0, single buffered']
    %8 = vsyncpa [#allocation3], 0
    %9 = vsyncpa [#allocation4], 0
    // Predicated region
    $region2: #{actor_forward.1} parent=1 // pred_check
      _
    $region3: #{actor_forward.1} parent=1 // pred_check_branch
      %11 = sbr.rel (0) target = $region5
    $region4: #{actor_forward.1} parent=1 // pred_region
      _
    $region5: #{actor_forward.1} parent=1 // pred_fallthru
      _
    // Predicated region
    $region6: #{actor_forward.1} parent=1 // pred_check
      _
    $region7: #{actor_forward.1} parent=1 // pred_check_branch
      %13 = sbr.rel (0) target = $region9
    $region8: #{actor_forward.1} parent=1 // pred_region
      %s15 = ssub.s32 3072, 3072
      %16 = vsyncadd [#allocation3], %s15
      %s17 = sshll.u32 [#allocation2], 4
      %s18 = int_to_ptr.vmem [resolvable:$true] %s17
      %23 = dma.hbm_to_vmem [thread:$0]  %s1, 3072, %s18, [#allocation3], 64, 64, 4
    $region9: #{actor_forward.1} parent=1 // pred_fallthru
      _
    // Predicated region
    $region10: #{actor_forward.1} parent=1 // pred_check
      _
    $region11: #{actor_forward.1} parent=1 // pred_check_branch
      %25 = sbr.rel (0) target = $region13
    $region12: #{actor_forward.1} parent=1 // pred_region
      _
    $region13: #{actor_forward.1} parent=1 // pred_fallthru
      _
    // Predicated region
    $region14: #{actor_forward.1} parent=1 // pred_check
      _
    $region15: #{actor_forward.1} parent=1 // pred_check_branch
      %27 = sbr.rel (0) target = $region17
    $region16: #{actor_forward.1} parent=1 // pred_region
      %28 = dma.done [#allocation3], 3072
    $region17: #{actor_forward.1} parent=1 // pred_fallthru
      _
    %v30 = vld [vmem:[%s0] sm:$0xff]
    %v31 = vpack.c.bf16 %v30, %v30
    %v32 = vld [vmem:[#allocation2] sm:$0xf]
    %v33 = vld [vmem:[#allocation2 + $0x4] sm:$0xf]
    %v34 = vld [vmem:[#allocation2 + $0x8] sm:$0xf]
    %v35 = vld [vmem:[#allocation2 + $0xc] sm:$0xf]
    %v36 = vld [vmem:[#allocation2 + $0x10] sm:$0xf]
    %v37 = vld [vmem:[#allocation2 + $0x14] sm:$0xf]
    %v38 = vld [vmem:[#allocation2 + $0x18] sm:$0xf]
    %v39 = vld [vmem:[#allocation2 + $0x1c] sm:$0xf]
    %v40 = vld [vmem:[#allocation2 + $0x20] sm:$0xf]
    %v41 = vld [vmem:[#allocation2 + $0x24] sm:$0xf]
    %v42 = vld [vmem:[#allocation2 + $0x28] sm:$0xf]
    %v43 = vld [vmem:[#allocation2 + $0x2c] sm:$0xf]
    %v44 = vld [vmem:[#allocation2 + $0x30] sm:$0xf]
    %v45 = vld [vmem:[#allocation2 + $0x34] sm:$0xf]
    %v46 = vld [vmem:[#allocation2 + $0x38] sm:$0xf]
    %v47 = vld [vmem:[#allocation2 + $0x3c] sm:$0xf]
    %v48 = vld [vmem:[%s2] sm:$0x1]
    %v50 = vlaneseq
    %v51 = vshrl.u32 %v50, 7
    %v52 = vsub.s32 0, %v51
    %v53 = vrot.slane %v48, %v52
    %v71 = vunpack.c.l.b16 %v32
    %v72 = vunpack.c.l.b16 %v33
    %v73 = vunpack.c.l.b16 %v34
    %v74 = vunpack.c.l.b16 %v35
    %v75 = vunpack.c.l.b16 %v36
    %v76 = vunpack.c.l.b16 %v37
    %v77 = vunpack.c.l.b16 %v38
    %v78 = vunpack.c.l.b16 %v39
    %v79 = vunpack.c.l.b16 %v40
    %v80 = vunpack.c.l.b16 %v41
    %v81 = vunpack.c.l.b16 %v42
    %v82 = vunpack.c.l.b16 %v43
    %v83 = vunpack.c.l.b16 %v44
    %v84 = vunpack.c.l.b16 %v45
    %v85 = vunpack.c.l.b16 %v46
    %v86 = vunpack.c.l.b16 %v47
    %v87 = vpack.c.b16 %v72, %v71
    %v88 = vpack.c.b16 %v74, %v73
    %v89 = vpack.c.b16 %v76, %v75
    %v90 = vpack.c.b16 %v78, %v77
    %v91 = vpack.c.b16 %v80, %v79
    %v92 = vpack.c.b16 %v82, %v81
    %v93 = vpack.c.b16 %v84, %v83
    %v94 = vpack.c.b16 %v86, %v85
    %103 = vmatprep.subr.bf16.mxu0 0
    %104 = vmatpush1.bf16.msra.mxu0 %v87
    %105 = vmatprep.subr.bf16.mxu0 0
    %106 = vmatpush1.bf16.msra.mxu0 %v88
    %107 = vmatprep.subr.bf16.mxu0 0
    %108 = vmatpush1.bf16.msra.mxu0 %v89
    %109 = vmatprep.subr.bf16.mxu0 0
    %110 = vmatpush1.bf16.msra.mxu0 %v90
    %111 = vmatprep.subr.bf16.mxu0 0
    %112 = vmatpush1.bf16.msra.mxu0 %v91
    %113 = vmatprep.subr.bf16.mxu0 0
    %114 = vmatpush1.bf16.msra.mxu0 %v92
    %115 = vmatprep.subr.bf16.mxu0 0
    %116 = vmatpush1.bf16.msra.mxu0 %v93
    %117 = vmatprep.subr.bf16.mxu0 0
    %118 = vmatpush1.bf16.msra.mxu0 %v94
    %119 = vmatprep.subr.bf16.mxu0 0
    %120 = vmatpush1.bf16.msra.mxu0 0
    %121 = vmatprep.subr.bf16.mxu0 0
    %122 = vmatpush1.bf16.msra.mxu0 0
    %123 = vmatprep.subr.bf16.mxu0 0
    %124 = vmatpush1.bf16.msra.mxu0 0
    %125 = vmatprep.subr.bf16.mxu0 0
    %126 = vmatpush1.bf16.msra.mxu0 0
    %127 = vmatprep.subr.bf16.mxu0 0
    %128 = vmatpush1.bf16.msra.mxu0 0
    %129 = vmatprep.subr.bf16.mxu0 0
    %130 = vmatpush1.bf16.msra.mxu0 0
    %131 = vmatprep.subr.bf16.mxu0 0
    %132 = vmatpush1.bf16.msra.mxu0 0
    %133 = vmatprep.subr.bf16.mxu0 0
    %134 = vmatpush1.bf16.msra.mxu0 0
    %135 = vmatprep.mubr.bf16.mxu0 0
    %136 = vmatmul.mubr.bf16.gmra.mrb[0].mxu0 %v31
    %v137 = vpop.f32.mrb[0].mxu0
    %v138 = vadd.f32 %v53, %v137
    %v139 = vpop.f32.mrb[0].mxu0
    %v140 = vpop.f32.mrb[0].mxu0
    %v141 = vpop.f32.mrb[0].mxu0
    %142 = vdwg.mxu0
    %v143 = vtanh.pop %v138
    %v144 = vpack.c.bf16 %v143, %v143
    %s145 = scalar_lea.vmem [#allocation2], 64
    %v146 = vld [vmem:[%s145] sm:$0xf]
    %v147 = vld [vmem:[%s145 + $0x4] sm:$0xf]
    %v148 = vld [vmem:[%s145 + $0x8] sm:$0xf]
    %v149 = vld [vmem:[%s145 + $0xc] sm:$0xf]
    %v150 = vld [vmem:[%s145 + $0x10] sm:$0xf]
    %v151 = vld [vmem:[%s145 + $0x14] sm:$0xf]
    %v152 = vld [vmem:[%s145 + $0x18] sm:$0xf]
    %v153 = vld [vmem:[%s145 + $0x1c] sm:$0xf]
    %v154 = vld [vmem:[%s145 + $0x20] sm:$0xf]
    %v155 = vld [vmem:[%s145 + $0x24] sm:$0xf]
    %v156 = vld [vmem:[%s145 + $0x28] sm:$0xf]
    %v157 = vld [vmem:[%s145 + $0x2c] sm:$0xf]
    %v158 = vld [vmem:[%s145 + $0x30] sm:$0xf]
    %v159 = vld [vmem:[%s145 + $0x34] sm:$0xf]
    %v160 = vld [vmem:[%s145 + $0x38] sm:$0xf]
    %v161 = vld [vmem:[%s145 + $0x3c] sm:$0xf]
    %s162 = scalar_lea.vmem %s2, 1
    %v163 = vld [vmem:[%s162] sm:$0x1]
    %v165 = vlaneseq
    %v166 = vshrl.u32 %v165, 7
    %v167 = vsub.s32 0, %v166
    %v168 = vrot.slane %v163, %v167
    %v186 = vunpack.c.l.b16 %v146
    %v187 = vunpack.c.l.b16 %v147
    %v188 = vunpack.c.l.b16 %v148
    %v189 = vunpack.c.l.b16 %v149
    %v190 = vunpack.c.l.b16 %v150
    %v191 = vunpack.c.l.b16 %v151
    %v192 = vunpack.c.l.b16 %v152
    %v193 = vunpack.c.l.b16 %v153
    %v194 = vunpack.c.l.b16 %v154
    %v195 = vunpack.c.l.b16 %v155
    %v196 = vunpack.c.l.b16 %v156
    %v197 = vunpack.c.l.b16 %v157
    %v198 = vunpack.c.l.b16 %v158
    %v199 = vunpack.c.l.b16 %v159
    %v200 = vunpack.c.l.b16 %v160
    %v201 = vunpack.c.l.b16 %v161
    %v202 = vpack.c.b16 %v187, %v186
    %v203 = vpack.c.b16 %v189, %v188
    %v204 = vpack.c.b16 %v191, %v190
    %v205 = vpack.c.b16 %v193, %v192
    %v206 = vpack.c.b16 %v195, %v194
    %v207 = vpack.c.b16 %v197, %v196
    %v208 = vpack.c.b16 %v199, %v198
    %v209 = vpack.c.b16 %v201, %v200
    %218 = vmatprep.subr.bf16.mxu0 0
    %219 = vmatpush1.bf16.msra.mxu0 %v202
    %220 = vmatprep.subr.bf16.mxu0 0
    %221 = vmatpush1.bf16.msra.mxu0 %v203
    %222 = vmatprep.subr.bf16.mxu0 0
    %223 = vmatpush1.bf16.msra.mxu0 %v204
    %224 = vmatprep.subr.bf16.mxu0 0
    %225 = vmatpush1.bf16.msra.mxu0 %v205
    %226 = vmatprep.subr.bf16.mxu0 0
    %227 = vmatpush1.bf16.msra.mxu0 %v206
    %228 = vmatprep.subr.bf16.mxu0 0
    %229 = vmatpush1.bf16.msra.mxu0 %v207
    %230 = vmatprep.subr.bf16.mxu0 0
    %231 = vmatpush1.bf16.msra.mxu0 %v208
    %232 = vmatprep.subr.bf16.mxu0 0
    %233 = vmatpush1.bf16.msra.mxu0 %v209
    %234 = vmatprep.subr.bf16.mxu0 0
    %235 = vmatpush1.bf16.msra.mxu0 0
    %236 = vmatprep.subr.bf16.mxu0 0
    %237 = vmatpush1.bf16.msra.mxu0 0
    %238 = vmatprep.subr.bf16.mxu0 0
    %239 = vmatpush1.bf16.msra.mxu0 0
    %240 = vmatprep.subr.bf16.mxu0 0
    %241 = vmatpush1.bf16.msra.mxu0 0
    %242 = vmatprep.subr.bf16.mxu0 0
    %243 = vmatpush1.bf16.msra.mxu0 0
    %244 = vmatprep.subr.bf16.mxu0 0
    %245 = vmatpush1.bf16.msra.mxu0 0
    %246 = vmatprep.subr.bf16.mxu0 0
    %247 = vmatpush1.bf16.msra.mxu0 0
    %248 = vmatprep.subr.bf16.mxu0 0
    %249 = vmatpush1.bf16.msra.mxu0 0
    %250 = vmatprep.mubr.bf16.mxu0 0
    %251 = vmatmul.mubr.bf16.gmra.mrb[0].mxu0 %v144
    %v252 = vpop.f32.mrb[0].mxu0
    %v253 = vadd.f32 %v168, %v252
    %v254 = vpop.f32.mrb[0].mxu0
    %v255 = vpop.f32.mrb[0].mxu0
    %v256 = vpop.f32.mrb[0].mxu0
    %257 = vdwg.mxu0
    %v258 = vtanh.pop %v253
    %v259 = vpack.c.bf16 %v258, %v258
    %s260 = scalar_lea.vmem [#allocation2], 128
    %v261 = vld [vmem:[%s260] sm:$0xf]
    %v262 = vld [vmem:[%s260 + $0x4] sm:$0xf]
    %v263 = vld [vmem:[%s260 + $0x8] sm:$0xf]
    %v264 = vld [vmem:[%s260 + $0xc] sm:$0xf]
    %v265 = vld [vmem:[%s260 + $0x10] sm:$0xf]
    %v266 = vld [vmem:[%s260 + $0x14] sm:$0xf]
    %v267 = vld [vmem:[%s260 + $0x18] sm:$0xf]
    %v268 = vld [vmem:[%s260 + $0x1c] sm:$0xf]
    %v269 = vld [vmem:[%s260 + $0x20] sm:$0xf]
    %v270 = vld [vmem:[%s260 + $0x24] sm:$0xf]
    %v271 = vld [vmem:[%s260 + $0x28] sm:$0xf]
    %v272 = vld [vmem:[%s260 + $0x2c] sm:$0xf]
    %v273 = vld [vmem:[%s260 + $0x30] sm:$0xf]
    %v274 = vld [vmem:[%s260 + $0x34] sm:$0xf]
    %v275 = vld [vmem:[%s260 + $0x38] sm:$0xf]
    %v276 = vld [vmem:[%s260 + $0x3c] sm:$0xf]
    %s277 = scalar_lea.vmem %s2, 2
    %v278 = vld [vmem:[%s277] sm:$0x1]
    %v280 = vlaneseq
    %v281 = vshrl.u32 %v280, 7
    %v282 = vsub.s32 0, %v281
    %v283 = vrot.slane %v278, %v282
    %v301 = vunpack.c.l.b16 %v261
    %v302 = vunpack.c.l.b16 %v262
    %v303 = vunpack.c.l.b16 %v263
    %v304 = vunpack.c.l.b16 %v264
    %v305 = vunpack.c.l.b16 %v265
    %v306 = vunpack.c.l.b16 %v266
    %v307 = vunpack.c.l.b16 %v267
    %v308 = vunpack.c.l.b16 %v268
    %v309 = vunpack.c.l.b16 %v269
    %v310 = vunpack.c.l.b16 %v270
    %v311 = vunpack.c.l.b16 %v271
    %v312 = vunpack.c.l.b16 %v272
    %v313 = vunpack.c.l.b16 %v273
    %v314 = vunpack.c.l.b16 %v274
    %v315 = vunpack.c.l.b16 %v275
    %v316 = vunpack.c.l.b16 %v276
    %v317 = vpack.c.b16 %v302, %v301
    %v318 = vpack.c.b16 %v304, %v303
    %v319 = vpack.c.b16 %v306, %v305
    %v320 = vpack.c.b16 %v308, %v307
    %v321 = vpack.c.b16 %v310, %v309
    %v322 = vpack.c.b16 %v312, %v311
    %v323 = vpack.c.b16 %v314, %v313
    %v324 = vpack.c.b16 %v316, %v315
    %333 = vmatprep.subr.bf16.mxu0 0
    %334 = vmatpush1.bf16.msra.mxu0 %v317
    %335 = vmatprep.subr.bf16.mxu0 0
    %336 = vmatpush1.bf16.msra.mxu0 %v318
    %337 = vmatprep.subr.bf16.mxu0 0
    %338 = vmatpush1.bf16.msra.mxu0 %v319
    %339 = vmatprep.subr.bf16.mxu0 0
    %340 = vmatpush1.bf16.msra.mxu0 %v320
    %341 = vmatprep.subr.bf16.mxu0 0
    %342 = vmatpush1.bf16.msra.mxu0 %v321
    %343 = vmatprep.subr.bf16.mxu0 0
    %344 = vmatpush1.bf16.msra.mxu0 %v322
    %345 = vmatprep.subr.bf16.mxu0 0
    %346 = vmatpush1.bf16.msra.mxu0 %v323
    %347 = vmatprep.subr.bf16.mxu0 0
    %348 = vmatpush1.bf16.msra.mxu0 %v324
    %349 = vmatprep.subr.bf16.mxu0 0
    %350 = vmatpush1.bf16.msra.mxu0 0
    %351 = vmatprep.subr.bf16.mxu0 0
    %352 = vmatpush1.bf16.msra.mxu0 0
    %353 = vmatprep.subr.bf16.mxu0 0
    %354 = vmatpush1.bf16.msra.mxu0 0
    %355 = vmatprep.subr.bf16.mxu0 0
    %356 = vmatpush1.bf16.msra.mxu0 0
    %357 = vmatprep.subr.bf16.mxu0 0
    %358 = vmatpush1.bf16.msra.mxu0 0
    %359 = vmatprep.subr.bf16.mxu0 0
    %360 = vmatpush1.bf16.msra.mxu0 0
    %361 = vmatprep.subr.bf16.mxu0 0
    %362 = vmatpush1.bf16.msra.mxu0 0
    %363 = vmatprep.subr.bf16.mxu0 0
    %364 = vmatpush1.bf16.msra.mxu0 0
    %365 = vmatprep.mubr.bf16.mxu0 0
    %366 = vmatmul.mubr.bf16.gmra.mrb[0].mxu0 %v259
    %v367 = vpop.f32.mrb[0].mxu0
    %v368 = vadd.f32 %v283, %v367
    %v369 = vpop.f32.mrb[0].mxu0
    %v370 = vpop.f32.mrb[0].mxu0
    %v371 = vpop.f32.mrb[0].mxu0
    %372 = vdwg.mxu0
    %v373 = vtanh.pop %v368
    %374 = vst [vmem:[#allocation5] sm:$0xff] %v373
    // Predicated region
    $region18: #{actor_forward.1} parent=1 // pred_check
      _
    $region19: #{actor_forward.1} parent=1 // pred_check_branch
      %376 = sbr.rel (0) target = $region21
    $region20: #{actor_forward.1} parent=1 // pred_region
      %s378 = ssub.s32 128, 128
      %379 = vsyncadd [#allocation4], %s378
      %s381 = sshll.u32 [#allocation5], 4
      %s382 = int_to_ptr.vmem [resolvable:$true] %s381
      %384 = dma.vmem_to_hbm [thread:$0]  %s382, 128, %s3, [#allocation4]
    $region21: #{actor_forward.1} parent=1 // pred_fallthru
      _
    // Predicated region
    $region22: #{actor_forward.1} parent=1 // pred_check
      _
    $region23: #{actor_forward.1} parent=1 // pred_check_branch
      %386 = sbr.rel (0) target = $region25
    $region24: #{actor_forward.1} parent=1 // pred_region
      %387 = dma.done [#allocation4], 128
    $region25: #{actor_forward.1} parent=1 // pred_fallthru
      _
    %388 = vsyncpa [#allocation3], 1
    %389 = vsyncpa [#allocation4], 1

</llo_original>
